<compile_context>
chip_gen: v7x
topology: tpu7x:2x2x1
jax: 0.10.0
libtpu: 0.0.40
codegen_flags: <defaults>
</compile_context>

<pallas_src>
import functools

import jax
import jax.numpy as jnp
import numpy as np
from jax import lax
from jax.experimental import pallas as pl
from jax.experimental.pallas import tpu as pltpu


# ----------------------------------------------------------------------------
# Pallas kernel: one grid step == (block_b batch elements) x (block_s tokens).
# ----------------------------------------------------------------------------
def _cws_gca_kernel(ea_ref, hs_ref, lvmt_ref, wl_ref, bl_ref, wc_ref, bc_ref,
                    ecw_ref, pred_ref, lab_ref,
                    *, num_classes, matmul_dtype, stable_softmax):
    bb, Wp, E = ea_ref.shape
    _, tS, H = hs_ref.shape
    L = wc_ref.shape[1]
    md = matmul_dtype

    ea = ea_ref[...]                      # (bb, Wp, E)  gathered word embeddings (W padded)
    hs = hs_ref[...]                      # (bb, tS, H)  encoder hidden states
    lvm = lvmt_ref[...]                   # (bb, Wp, tS) int32 label-value matrix (transposed)
    wl = wl_ref[...]                      # (E, H)       GCA linear W^T (pre-scaled by 1/temper)
    bl = bl_ref[...]                      # (1, H)       GCA linear bias (pre-scaled)
    wc = wc_ref[...]                      # (H, L)       classifier W^T
    bc = bc_ref[...]                      # (1, L)       classifier bias
    ecw = ecw_ref[...]                    # (C, L)       emb_c @ wc  (host-fused)

    # GCA linear (1/sqrt(H) folded on host).  Wp is a multiple of 8, so the
    # (bb*Wp, E) reshape does not cross sublane tiles.
    a = (jnp.dot(ea.reshape(bb * Wp, E).astype(md), wl.astype(md),
                 preferred_element_type=jnp.float32) + bl).reshape(bb, Wp, H)

    # u[b, w, s] = <a[b, w, :], hs[b, s, :]>  -- S sits on the lane axis so
    # the whole softmax / class-gather section runs on lane-dense vregs.
    u = lax.dot_general(a.astype(md), hs.astype(md),
                        dimension_numbers=(((2,), (2,)), ((0,), (0,))),
                        preferred_element_type=jnp.float32)          # (bb, Wp, tS)

    # Masked exp-normalization (reference has no max-shift; the shift is
    # mathematically identity for p and prevents exp overflow, so keep it on).
    mask = lvm > 0
    if stable_softmax:
        m = jnp.max(jnp.where(mask, u, 0.0), axis=1, keepdims=True)   # (bb, 1, tS)
        delta = jnp.where(mask, jnp.exp(u - m), 0.0)
    else:
        delta = jnp.exp(u) * mask.astype(jnp.float32)
    denom = jnp.sum(delta, axis=1, keepdims=True) + 1e-10
    p = delta * pl.reciprocal(denom, approx=True)                     # (bb, Wp, tS)

    # Per-class attention mass q[b,s,c] = sum_w p[b,w,s] * [lvm[b,w,s] == c].
    # (class 0 is padding; p is already zero there, so including it is exact.)
    q = jnp.stack(
        [jnp.sum(jnp.where(lvm == c, p, 0.0), axis=1) for c in range(num_classes)],
        axis=-1)                                                      # (bb, tS, C)

    # Fused classifier: pred = hs @ wc + q @ (emb_c @ wc) + bc.
    # TODO(synk): pred's last dim L=5 forces masked stores; emit transposed
    # (B, L, S) + wrapper fixup if the store path ever shows up in profiles.
    hs2 = hs.reshape(bb * tS, H)
    q2 = q.reshape(bb * tS, num_classes)
    pred2 = (jnp.dot(hs2.astype(md), wc.astype(md), preferred_element_type=jnp.float32)
             + jnp.dot(q2.astype(md), ecw.astype(md), preferred_element_type=jnp.float32)
             + bc)                                                    # (bb*tS, L)

    pred_ref[...] = pred2.reshape(bb, tS, L)
    lab_ref[...] = jnp.argmax(pred2, axis=-1).astype(jnp.int32).reshape(bb, tS)


# ----------------------------------------------------------------------------
# Wrapper: small glue (n-gram gather, temper fold, emb_c fusion) + pallas_call.
# ----------------------------------------------------------------------------
def cws_forward(sequence_output, word_seq, label_value_matrix, params,
                *, block_b=None, block_s=None, matmul_dtype=jnp.bfloat16,
                stable_softmax=True):
    """Forward pass of CWS (eval mode, use_gca=True, use_crf=False)."""
    B, S, H = sequence_output.shape
    W = word_seq.shape[1]

    emb_a = params["emb_a"]          # (V, E)   word_embedding_a
    emb_c = params["emb_c"]          # (C, H)   word_embedding_c (C=6)
    wl = params["wl"]                # (E, H)   GCA linear weight, pre-transposed
    bl = params["bl"]                # (1, H)
    wc = params["wc"]                # (H, L)   classifier weight, pre-transposed
    bc = params["bc"]                # (1, L)
    E = emb_a.shape[1]
    C = emb_c.shape[0]
    L = wc.shape[1]

    # Host-side fold of 1/sqrt(H) into the GCA linear.
    temper = float(H) ** 0.5
    wl_s = (wl / temper).astype(jnp.float32)
    bl_s = (bl / temper).astype(jnp.float32)

    # Algebraic fusion of emb_c into the classifier.
    ecw = (emb_c @ wc).astype(jnp.float32)                 # (C, L)

    # Glue: data-dependent n-gram embedding gather stays in plain JAX (tiny).
    ea_g = jnp.take(emb_a, word_seq, axis=0)               # (B, W, E)

    # Pad W up to a sublane multiple; padded rows have lvm=0 -> masked out.
    Wp = max(8, ((W + 7) // 8) * 8)
    if Wp != W:
        ea_g = jnp.pad(ea_g, ((0, 0), (0, Wp - W), (0, 0)))
    # lvm pre-transposed so S is lane-dense inside the kernel.
    lvm_t = jnp.transpose(label_value_matrix, (0, 2, 1)).astype(jnp.int32)   # (B, W, S)
    if Wp != W:
        lvm_t = jnp.pad(lvm_t, ((0, 0), (0, Wp - W), (0, 0)))

    # Batch / sequence tiling.  block_b must be full B or a multiple of 8
    # (label-output sublane rule); block_s full S or a multiple of 128.
    if block_b is None:
        block_b = 8 if (B > 8 and B % 8 == 0) else B
    assert B % block_b == 0, "block_b must divide the batch"
    if block_s is None:
        if S % 256 == 0 and S > 256:
            block_s = 256
        elif S % 128 == 0 and S > 128:
            block_s = 128
        else:
            block_s = S
    assert S % block_s == 0, "block_s must divide the sequence length"
    grid = (B // block_b, S // block_s)

    # Scoped-VMEM limit sized from the block set, clamped under v7x's 64 MiB.
    lane = 128
    blk_bytes = 4 * (block_b * block_s * H          # hs (f32)
                     + block_b * Wp * block_s       # lvm (i32)
                     + block_b * Wp * E             # ea (f32)
                     + block_b * block_s * lane     # pred block (lane-padded)
                     + block_b * block_s)           # labels (i32)
    wt_bytes = 4 * (E * H + H + H * lane + lane + C * lane)
    vmem_limit = int(min(max(4 * blk_bytes + wt_bytes + (8 << 20), 32 << 20), 48 << 20))

    kernel = functools.partial(_cws_gca_kernel, num_classes=C,
                               matmul_dtype=matmul_dtype,
                               stable_softmax=stable_softmax)

    pred, labels = pl.pallas_call(
        kernel,
        out_shape=(
            jax.ShapeDtypeStruct((B, S, L), jnp.float32),
            jax.ShapeDtypeStruct((B, S), jnp.int32),
        ),
        grid=grid,
        in_specs=[
            pl.BlockSpec((block_b, Wp, E), lambda b, s: (b, 0, 0)),       # gathered emb_a
            pl.BlockSpec((block_b, block_s, H), lambda b, s: (b, s, 0)),  # hidden states
            pl.BlockSpec((block_b, Wp, block_s), lambda b, s: (b, 0, s)), # lvm (transposed)
            pl.BlockSpec((E, H), lambda b, s: (0, 0)),                    # GCA W^T (scaled)
            pl.BlockSpec((1, H), lambda b, s: (0, 0)),                    # GCA bias (scaled)
            pl.BlockSpec((H, L), lambda b, s: (0, 0)),                    # classifier W^T
            pl.BlockSpec((1, L), lambda b, s: (0, 0)),                    # classifier bias
            pl.BlockSpec((C, L), lambda b, s: (0, 0)),                    # emb_c @ wc
        ],
        out_specs=(
            pl.BlockSpec((block_b, block_s, L), lambda b, s: (b, s, 0)),
            pl.BlockSpec((block_b, block_s), lambda b, s: (b, s)),        # lane-dense labels
        ),
        compiler_params=pltpu.CompilerParams(
            dimension_semantics=("parallel", "parallel"),
            vmem_limit_bytes=vmem_limit),
    )(ea_g, sequence_output, lvm_t, wl_s, bl_s, wc, bc, ecw)

    return labels, pred      # matches torch: (pre_labels, pred)


# ----------------------------------------------------------------------------
# Pure-JAX reference (mirrors the torch forward) for validation.
# ----------------------------------------------------------------------------
def cws_reference(sequence_output, word_seq, label_value_matrix, params):
    H = sequence_output.shape[-1]
    temper = float(H) ** 0.5
    ea = jnp.take(params["emb_a"], word_seq, axis=0)               # (B, W, E)
    ec = jnp.take(params["emb_c"], label_value_matrix, axis=0)     # (B, S, W, H)
    a = ea @ params["wl"] + params["bl"][0]                        # (B, W, H)
    u = jnp.einsum("bsh,bwh->bsw", sequence_output, a) / temper
    mask = jnp.clip(label_value_matrix, 0, 1).astype(jnp.float32)
    delta = jnp.exp(u) * mask
    p = delta / (jnp.sum(delta, axis=2, keepdims=True) + 1e-10)
    o = jnp.sum(p[..., None] * ec, axis=2)                         # (B, S, H)
    valid = sequence_output + o
    pred = valid @ params["wc"] + params["bc"][0]
    return jnp.argmax(pred, axis=2), pred


# ----------------------------------------------------------------------------
# Main
# ----------------------------------------------------------------------------
if __name__ == "__main__":
    # Small shapes consistent with the module's forward.
    B, S, H = 2, 8, 32          # batch, seq length, encoder hidden size
    W = 6                       # word-seq (n-gram) length
    E = 16                      # GCA embedding_dim
    V = 12                      # len(gram2id)
    L = 5                       # num_labels = len(labelmap) + 1  (labelmap={B,I,E,S})
    C = 6                       # word_embedding_c rows

    key = jax.random.PRNGKey(0)
    ks = jax.random.split(key, 9)

    params = {
        "emb_a": 0.1 * jax.random.normal(ks[0], (V, E), jnp.float32),
        "emb_c": 0.1 * jax.random.normal(ks[1], (C, H), jnp.float32),
        "wl":    0.1 * jax.random.normal(ks[2], (E, H), jnp.float32),   # linear.weight.T
        "bl":    0.1 * jax.random.normal(ks[3], (1, H), jnp.float32),
        "wc":    0.1 * jax.random.normal(ks[4], (H, L), jnp.float32),   # classifier.weight.T
        "bc":    0.1 * jax.random.normal(ks[5], (1, L), jnp.float32),
    }

    # Stand-in for BERT's sequence_output (hidden states) and the GCA inputs.
    sequence_output = jax.random.normal(ks[6], (B, S, H), jnp.float32)
    word_seq = jax.random.randint(ks[7], (B, W), 0, V, dtype=jnp.int32)
    label_value_matrix = jax.random.randint(ks[8], (B, S, W), 0, C, dtype=jnp.int32)

    ref_labels, ref_pred = cws_reference(
        sequence_output, word_seq, label_value_matrix, params)
    ref_pred_np = np.asarray(ref_pred)

    # ---- f32 matmul path: validated tightly against the reference ----
    labels, pred = jax.block_until_ready(
        cws_forward(sequence_output, word_seq, label_value_matrix, params,
                    matmul_dtype=jnp.float32))
    np.testing.assert_allclose(np.asarray(pred), ref_pred_np, rtol=5e-3, atol=1e-3)

    # Label check: require agreement wherever the reference top-2 margin is not
    # tiny (approx EUP reciprocal perturbs logits by ~1e-3 at most).
    srt = np.sort(ref_pred_np, axis=-1)
    margin = srt[..., -1] - srt[..., -2]
    mism = np.asarray(labels) != np.asarray(ref_labels)
    assert not np.any(mism & (margin > 1e-2)), "label mismatch beyond tolerance"

    # ---- default bf16 matmul path (MXU-native): looser tolerance ----
    labels_bf16, pred_bf16 = jax.block_until_ready(
        cws_forward(sequence_output, word_seq, label_value_matrix, params))
    np.testing.assert_allclose(np.asarray(pred_bf16), ref_pred_np,
                               rtol=1e-1, atol=1e-1)

    print("KERNEL_OK")
</pallas_src>

<mosaic_0001>
module attributes {stable_mosaic.version = 11 : i64} {
  func.func @_cws_gca_kernel(%arg0: i32, %arg1: i32, %arg2: memref<2x8x16xf32, #tpu.memory_space<vmem>>, %arg3: memref<2x8x32xf32, #tpu.memory_space<vmem>>, %arg4: memref<2x8x8xi32, #tpu.memory_space<vmem>>, %arg5: memref<16x32xf32, #tpu.memory_space<vmem>>, %arg6: memref<1x32xf32, #tpu.memory_space<vmem>>, %arg7: memref<32x5xf32, #tpu.memory_space<vmem>>, %arg8: memref<1x5xf32, #tpu.memory_space<vmem>>, %arg9: memref<6x5xf32, #tpu.memory_space<vmem>>, %arg10: memref<2x8x5xf32, #tpu.memory_space<vmem>>, %arg11: memref<2x8xi32, #tpu.memory_space<vmem>>) attributes {dimension_semantics = [#tpu.dimension_semantics<parallel>, #tpu.dimension_semantics<parallel>], iteration_bounds = array<i64: 1, 1>, scalar_prefetch = 0 : i64, scratch_operands = 0 : i64, tpu.core_type = #tpu.core_type<tc>, window_params = [{transform_indices = @transform_0, window_bounds = array<i64: 2, 8, 16>}, {transform_indices = @transform_1, window_bounds = array<i64: 2, 8, 32>}, {transform_indices = @transform_2, window_bounds = array<i64: 2, 8, 8>}, {pipeline_mode = #tpu.pipeline_mode<synchronous>, transform_indices = @transform_3, window_bounds = array<i64: 16, 32>}, {pipeline_mode = #tpu.pipeline_mode<synchronous>, transform_indices = @transform_4, window_bounds = array<i64: 1, 32>}, {pipeline_mode = #tpu.pipeline_mode<synchronous>, transform_indices = @transform_5, window_bounds = array<i64: 32, 5>}, {pipeline_mode = #tpu.pipeline_mode<synchronous>, transform_indices = @transform_6, window_bounds = array<i64: 1, 5>}, {pipeline_mode = #tpu.pipeline_mode<synchronous>, transform_indices = @transform_7, window_bounds = array<i64: 6, 5>}, {transform_indices = @transform_8, window_bounds = array<i64: 2, 8, 5>}, {transform_indices = @transform_9, window_bounds = array<i64: 2, 8>}]} {
    %c0 = arith.constant 0 : index
    %c0_0 = arith.constant 0 : index
    %c0_1 = arith.constant 0 : index
    %0 = vector.load %arg2[%c0, %c0_0, %c0_1] : memref<2x8x16xf32, #tpu.memory_space<vmem>>, vector<2x8x16xf32>
    %c0_2 = arith.constant 0 : index
    %c0_3 = arith.constant 0 : index
    %c0_4 = arith.constant 0 : index
    %1 = vector.load %arg3[%c0_2, %c0_3, %c0_4] : memref<2x8x32xf32, #tpu.memory_space<vmem>>, vector<2x8x32xf32>
    %c0_5 = arith.constant 0 : index
    %c0_6 = arith.constant 0 : index
    %c0_7 = arith.constant 0 : index
    %2 = vector.load %arg4[%c0_5, %c0_6, %c0_7] : memref<2x8x8xi32, #tpu.memory_space<vmem>>, vector<2x8x8xi32>
    %c0_8 = arith.constant 0 : index
    %c0_9 = arith.constant 0 : index
    %3 = vector.load %arg5[%c0_8, %c0_9] : memref<16x32xf32, #tpu.memory_space<vmem>>, vector<16x32xf32>
    %c0_10 = arith.constant 0 : index
    %c0_11 = arith.constant 0 : index
    %4 = vector.load %arg6[%c0_10, %c0_11] : memref<1x32xf32, #tpu.memory_space<vmem>>, vector<1x32xf32>
    %c0_12 = arith.constant 0 : index
    %c0_13 = arith.constant 0 : index
    %5 = vector.load %arg7[%c0_12, %c0_13] : memref<32x5xf32, #tpu.memory_space<vmem>>, vector<32x5xf32>
    %c0_14 = arith.constant 0 : index
    %c0_15 = arith.constant 0 : index
    %6 = vector.load %arg8[%c0_14, %c0_15] : memref<1x5xf32, #tpu.memory_space<vmem>>, vector<1x5xf32>
    %c0_16 = arith.constant 0 : index
    %c0_17 = arith.constant 0 : index
    %7 = vector.load %arg9[%c0_16, %c0_17] : memref<6x5xf32, #tpu.memory_space<vmem>>, vector<6x5xf32>
    %8 = vector.shape_cast %0 : vector<2x8x16xf32> to vector<16x16xf32>
    %cst = arith.constant dense<0.000000e+00> : vector<16x32xf32>
    %9 = tpu.matmul %8, %3, %cst {dimension_numbers = #tpu.dot_dimension_numbers<[1], [0], [0], [1], [0, 0, 1, 1], [], []>} : vector<16x16xf32>, vector<16x32xf32>, vector<16x32xf32> -> vector<16x32xf32>
    %10 = vector.broadcast %4 : vector<1x32xf32> to vector<16x32xf32>
    %11 = arith.addf %9, %10 : vector<16x32xf32>
    %12 = vector.shape_cast %11 : vector<16x32xf32> to vector<2x8x32xf32>
    %cst_18 = arith.constant dense<0.000000e+00> : vector<2x8x8xf32>
    %13 = tpu.matmul %12, %1, %cst_18 {dimension_numbers = #tpu.dot_dimension_numbers<[2], [2], [1], [1], [0, 0, 0, 1, 1, 1], [0], [0]>} : vector<2x8x32xf32>, vector<2x8x32xf32>, vector<2x8x8xf32> -> vector<2x8x8xf32>
    %c0_i32 = arith.constant 0 : i32
    %14 = vector.broadcast %c0_i32 : i32 to vector<2x8x8xi32>
    %15 = arith.cmpi sgt, %2, %14 : vector<2x8x8xi32>
    %cst_19 = arith.constant 0.000000e+00 : f32
    %16 = vector.broadcast %cst_19 : f32 to vector<2x8x8xf32>
    %17 = arith.select %15, %13, %16 : vector<2x8x8xi1>, vector<2x8x8xf32>
    %cst_20 = arith.constant dense<0xFF800000> : vector<2x8xf32>
    %18 = vector.multi_reduction <maximumf>, %17, %cst_20 [1] : vector<2x8x8xf32> to vector<2x8xf32>
    %19 = vector.shape_cast %18 : vector<2x8xf32> to vector<2x1x8xf32>
    %20 = vector.broadcast %19 : vector<2x1x8xf32> to vector<2x8x8xf32>
    %21 = arith.subf %13, %20 : vector<2x8x8xf32>
    %22 = math.exp %21 : vector<2x8x8xf32>
    %cst_21 = arith.constant 0.000000e+00 : f32
    %23 = vector.broadcast %cst_21 : f32 to vector<2x8x8xf32>
    %24 = arith.select %15, %22, %23 : vector<2x8x8xi1>, vector<2x8x8xf32>
    %cst_22 = arith.constant dense<0.000000e+00> : vector<2x8xf32>
    %25 = vector.multi_reduction <add>, %24, %cst_22 [1] : vector<2x8x8xf32> to vector<2x8xf32>
    %26 = vector.shape_cast %25 : vector<2x8xf32> to vector<2x1x8xf32>
    %cst_23 = arith.constant 1.000000e-10 : f32
    %27 = vector.broadcast %cst_23 : f32 to vector<2x1x8xf32>
    %28 = arith.addf %26, %27 : vector<2x1x8xf32>
    %29 = tpu.reciprocal %28 {approx = true} : vector<2x1x8xf32> -> vector<2x1x8xf32>
    %30 = vector.broadcast %29 : vector<2x1x8xf32> to vector<2x8x8xf32>
    %31 = arith.mulf %24, %30 : vector<2x8x8xf32>
    %c0_i32_24 = arith.constant 0 : i32
    %32 = vector.broadcast %c0_i32_24 : i32 to vector<2x8x8xi32>
    %33 = arith.cmpi eq, %2, %32 : vector<2x8x8xi32>
    %cst_25 = arith.constant 0.000000e+00 : f32
    %34 = vector.broadcast %cst_25 : f32 to vector<2x8x8xf32>
    %35 = arith.select %33, %31, %34 : vector<2x8x8xi1>, vector<2x8x8xf32>
    %cst_26 = arith.constant dense<0.000000e+00> : vector<2x8xf32>
    %36 = vector.multi_reduction <add>, %35, %cst_26 [1] : vector<2x8x8xf32> to vector<2x8xf32>
    %c1_i32 = arith.constant 1 : i32
    %37 = vector.broadcast %c1_i32 : i32 to vector<2x8x8xi32>
    %38 = arith.cmpi eq, %2, %37 : vector<2x8x8xi32>
    %cst_27 = arith.constant 0.000000e+00 : f32
    %39 = vector.broadcast %cst_27 : f32 to vector<2x8x8xf32>
    %40 = arith.select %38, %31, %39 : vector<2x8x8xi1>, vector<2x8x8xf32>
    %cst_28 = arith.constant dense<0.000000e+00> : vector<2x8xf32>
    %41 = vector.multi_reduction <add>, %40, %cst_28 [1] : vector<2x8x8xf32> to vector<2x8xf32>
    %c2_i32 = arith.constant 2 : i32
    %42 = vector.broadcast %c2_i32 : i32 to vector<2x8x8xi32>
    %43 = arith.cmpi eq, %2, %42 : vector<2x8x8xi32>
    %cst_29 = arith.constant 0.000000e+00 : f32
    %44 = vector.broadcast %cst_29 : f32 to vector<2x8x8xf32>
    %45 = arith.select %43, %31, %44 : vector<2x8x8xi1>, vector<2x8x8xf32>
    %cst_30 = arith.constant dense<0.000000e+00> : vector<2x8xf32>
    %46 = vector.multi_reduction <add>, %45, %cst_30 [1] : vector<2x8x8xf32> to vector<2x8xf32>
    %c3_i32 = arith.constant 3 : i32
    %47 = vector.broadcast %c3_i32 : i32 to vector<2x8x8xi32>
    %48 = arith.cmpi eq, %2, %47 : vector<2x8x8xi32>
    %cst_31 = arith.constant 0.000000e+00 : f32
    %49 = vector.broadcast %cst_31 : f32 to vector<2x8x8xf32>
    %50 = arith.select %48, %31, %49 : vector<2x8x8xi1>, vector<2x8x8xf32>
    %cst_32 = arith.constant dense<0.000000e+00> : vector<2x8xf32>
    %51 = vector.multi_reduction <add>, %50, %cst_32 [1] : vector<2x8x8xf32> to vector<2x8xf32>
    %c4_i32 = arith.constant 4 : i32
    %52 = vector.broadcast %c4_i32 : i32 to vector<2x8x8xi32>
    %53 = arith.cmpi eq, %2, %52 : vector<2x8x8xi32>
    %cst_33 = arith.constant 0.000000e+00 : f32
    %54 = vector.broadcast %cst_33 : f32 to vector<2x8x8xf32>
    %55 = arith.select %53, %31, %54 : vector<2x8x8xi1>, vector<2x8x8xf32>
    %cst_34 = arith.constant dense<0.000000e+00> : vector<2x8xf32>
    %56 = vector.multi_reduction <add>, %55, %cst_34 [1] : vector<2x8x8xf32> to vector<2x8xf32>
    %c5_i32 = arith.constant 5 : i32
    %57 = vector.broadcast %c5_i32 : i32 to vector<2x8x8xi32>
    %58 = arith.cmpi eq, %2, %57 : vector<2x8x8xi32>
    %cst_35 = arith.constant 0.000000e+00 : f32
    %59 = vector.broadcast %cst_35 : f32 to vector<2x8x8xf32>
    %60 = arith.select %58, %31, %59 : vector<2x8x8xi1>, vector<2x8x8xf32>
    %cst_36 = arith.constant dense<0.000000e+00> : vector<2x8xf32>
    %61 = vector.multi_reduction <add>, %60, %cst_36 [1] : vector<2x8x8xf32> to vector<2x8xf32>
    %62 = vector.shape_cast %36 : vector<2x8xf32> to vector<2x8x1xf32>
    %63 = vector.shape_cast %41 : vector<2x8xf32> to vector<2x8x1xf32>
    %64 = vector.shape_cast %46 : vector<2x8xf32> to vector<2x8x1xf32>
    %65 = vector.shape_cast %51 : vector<2x8xf32> to vector<2x8x1xf32>
    %66 = vector.shape_cast %56 : vector<2x8xf32> to vector<2x8x1xf32>
    %67 = vector.shape_cast %61 : vector<2x8xf32> to vector<2x8x1xf32>
    %68 = tpu.concatenate %62, %63, %64, %65, %66, %67 in 2 : vector<2x8x1xf32>, vector<2x8x1xf32>, vector<2x8x1xf32>, vector<2x8x1xf32>, vector<2x8x1xf32>, vector<2x8x1xf32> -> vector<2x8x6xf32>
    %69 = vector.shape_cast %1 : vector<2x8x32xf32> to vector<16x32xf32>
    %70 = vector.shape_cast %68 : vector<2x8x6xf32> to vector<16x6xf32>
    %cst_37 = arith.constant dense<0.000000e+00> : vector<16x5xf32>
    %71 = tpu.matmul %69, %5, %cst_37 {dimension_numbers = #tpu.dot_dimension_numbers<[1], [0], [0], [1], [0, 0, 1, 1], [], []>} : vector<16x32xf32>, vector<32x5xf32>, vector<16x5xf32> -> vector<16x5xf32>
    %cst_38 = arith.constant dense<0.000000e+00> : vector<16x5xf32>
    %72 = tpu.matmul %70, %7, %cst_38 {dimension_numbers = #tpu.dot_dimension_numbers<[1], [0], [0], [1], [0, 0, 1, 1], [], []>} : vector<16x6xf32>, vector<6x5xf32>, vector<16x5xf32> -> vector<16x5xf32>
    %73 = arith.addf %71, %72 : vector<16x5xf32>
    %74 = vector.broadcast %6 : vector<1x5xf32> to vector<16x5xf32>
    %75 = arith.addf %73, %74 : vector<16x5xf32>
    %76 = vector.shape_cast %75 : vector<16x5xf32> to vector<2x8x5xf32>
    %c0_39 = arith.constant 0 : index
    %c0_40 = arith.constant 0 : index
    %c0_41 = arith.constant 0 : index
    %77 = vector.load %arg10[%c0_39, %c0_40, %c0_41] : memref<2x8x5xf32, #tpu.memory_space<vmem>>, vector<2x8x5xf32>
    tpu.vector_store %arg10[%c0_39, %c0_40, %c0_41], %76 {strides = array<i32>} : memref<2x8x5xf32, #tpu.memory_space<vmem>>, vector<2x8x5xf32>,
    %78 = tpu.reduce_index %75 {axis = 1 : i32, kind = #tpu.reduction_kind<arg_max>} : vector<16x5xf32> -> vector<16xi32>
    %79 = vector.shape_cast %78 : vector<16xi32> to vector<2x8xi32>
    %c0_42 = arith.constant 0 : index
    %c0_43 = arith.constant 0 : index
    %80 = vector.load %arg11[%c0_42, %c0_43] : memref<2x8xi32, #tpu.memory_space<vmem>>, vector<2x8xi32>
    tpu.vector_store %arg11[%c0_42, %c0_43], %79 {strides = array<i32>} : memref<2x8xi32, #tpu.memory_space<vmem>>, vector<2x8xi32>,
    return
  }
  func.func @transform_0(%arg0: i32, %arg1: i32) -> (i32, i32, i32) {
    %c0_i32 = arith.constant 0 : i32
    %c0_i32_0 = arith.constant 0 : i32
    %c0_i32_1 = arith.constant 0 : i32
    return %arg0, %c0_i32, %c0_i32_0 : i32, i32, i32
  }
  func.func @transform_1(%arg0: i32, %arg1: i32) -> (i32, i32, i32) {
    %c0_i32 = arith.constant 0 : i32
    %c0_i32_0 = arith.constant 0 : i32
    return %arg0, %arg1, %c0_i32 : i32, i32, i32
  }
  func.func @transform_2(%arg0: i32, %arg1: i32) -> (i32, i32, i32) {
    %c0_i32 = arith.constant 0 : i32
    %c0_i32_0 = arith.constant 0 : i32
    return %arg0, %c0_i32, %arg1 : i32, i32, i32
  }
  func.func @transform_3(%arg0: i32, %arg1: i32) -> (i32, i32) {
    %c0_i32 = arith.constant 0 : i32
    %c0_i32_0 = arith.constant 0 : i32
    %c0_i32_1 = arith.constant 0 : i32
    return %c0_i32, %c0_i32_0 : i32, i32
  }
  func.func @transform_4(%arg0: i32, %arg1: i32) -> (i32, i32) {
    %c0_i32 = arith.constant 0 : i32
    %c0_i32_0 = arith.constant 0 : i32
    %c0_i32_1 = arith.constant 0 : i32
    return %c0_i32, %c0_i32_0 : i32, i32
  }
  func.func @transform_5(%arg0: i32, %arg1: i32) -> (i32, i32) {
    %c0_i32 = arith.constant 0 : i32
    %c0_i32_0 = arith.constant 0 : i32
    %c0_i32_1 = arith.constant 0 : i32
    return %c0_i32, %c0_i32_0 : i32, i32
  }
  func.func @transform_6(%arg0: i32, %arg1: i32) -> (i32, i32) {
    %c0_i32 = arith.constant 0 : i32
    %c0_i32_0 = arith.constant 0 : i32
    %c0_i32_1 = arith.constant 0 : i32
    return %c0_i32, %c0_i32_0 : i32, i32
  }
  func.func @transform_7(%arg0: i32, %arg1: i32) -> (i32, i32) {
    %c0_i32 = arith.constant 0 : i32
    %c0_i32_0 = arith.constant 0 : i32
    %c0_i32_1 = arith.constant 0 : i32
    return %c0_i32, %c0_i32_0 : i32, i32
  }
  func.func @transform_8(%arg0: i32, %arg1: i32) -> (i32, i32, i32) {
    %c0_i32 = arith.constant 0 : i32
    %c0_i32_0 = arith.constant 0 : i32
    return %arg0, %arg1, %c0_i32 : i32, i32, i32
  }
  func.func @transform_9(%arg0: i32, %arg1: i32) -> (i32, i32) {
    %c0_i32 = arith.constant 0 : i32
    return %arg0, %arg1 : i32, i32
  }
}

</mosaic_0001>

<llo_original>
// kernel: tpu_custom_call.1
$region0: #{tpu_custom_call.1}
  #allocation0 [shape = 'u32[]', space=smem, size = 0x4, offset = 0x4, fixed_abs, tag = 'smem constant byte address 0x4 - core index']
  #allocation1 [shape = 'u32[144,128]{1,0:T(1,128)}', space=vmem, size = 0x12000, scoped, tag = 'internal scratch']
  %s0 = inlined_call_operand.vmem [shape: f32[2,8,16], index: 0, kind: input, shape index: {}]
  %s1 = inlined_call_operand.vmem [shape: f32[2,8,32], index: 1, kind: input, shape index: {}]
  %s2 = inlined_call_operand.hbm [shape: s32[2,8,8], index: 2, kind: input, shape index: {}]
  %s3 = inlined_call_operand.vmem [shape: f32[16,32], index: 3, kind: input, shape index: {}]
  %s4 = inlined_call_operand.vmem [shape: f32[1,32], index: 4, kind: input, shape index: {}]
  %s5 = inlined_call_operand.vmem [shape: f32[32,5], index: 5, kind: input, shape index: {}]
  %s6 = inlined_call_operand.vmem [shape: f32[1,5], index: 6, kind: input, shape index: {}]
  %s7 = inlined_call_operand.vmem [shape: f32[6,5], index: 7, kind: input, shape index: {}]
  %s8 = inlined_call_operand.vmem [shape: f32[2,8,5], index: 8, kind: output, shape index: {0}]
  %s9 = inlined_call_operand.hbm [shape: s32[2,8], index: 9, kind: output, shape index: {1}]
  %10 = xla_tuple %s8, %s9
  %s11 = sld [smem:[#allocation0]]
  $region54: #{tpu_custom_call.1} parent=0
    _
  %s13 = ssub.s32 1, %s11
  %s14 = scalar_select 0, %s13, %s11
  $region1: #{tpu_custom_call.1} parent=0
    #allocation2 [shape = 'u8[8192]{0}', space=vmem, size = 0x2000, scoped, tag = 'input window, operand 2, single buffered']
    #allocation3 [shape = 's32[1]{0}', space=sflag, size = 0x4, scoped, tag = 'scoped memory for tpu_custom_call.1']
    #allocation4 [shape = 's32[1]{0}', space=sflag, size = 0x4, scoped, tag = 'scoped memory for tpu_custom_call.1']
    #allocation5 [shape = 'u8[1024]{0}', space=vmem, size = 0x400, scoped, tag = 'output window, operand 1, single buffered']
    %15 = vsyncpa [#allocation3], 0
    %16 = vsyncpa [#allocation4], 0
    // Predicated region
    $region2: #{tpu_custom_call.1} parent=1 // pred_check
      _
    $region3: #{tpu_custom_call.1} parent=1 // pred_check_branch
      %18 = sbr.rel (0) target = $region5
    $region4: #{tpu_custom_call.1} parent=1 // pred_region
      _
    $region5: #{tpu_custom_call.1} parent=1 // pred_fallthru
      _
    // Predicated region
    $region6: #{tpu_custom_call.1} parent=1 // pred_check
      _
    $region7: #{tpu_custom_call.1} parent=1 // pred_check_branch
      %20 = sbr.rel (0) target = $region9
    $region8: #{tpu_custom_call.1} parent=1 // pred_region
      _
    $region9: #{tpu_custom_call.1} parent=1 // pred_fallthru
      _
    // Predicated region
    $region10: #{tpu_custom_call.1} parent=1 // pred_check
      _
    $region11: #{tpu_custom_call.1} parent=1 // pred_check_branch
      %22 = sbr.rel (0) target = $region13
    $region12: #{tpu_custom_call.1} parent=1 // pred_region
      %s24 = ssub.s32 256, 256
      %25 = vsyncadd [#allocation3], %s24
      %s26 = sshll.u32 [#allocation2], 4
      %s27 = int_to_ptr.vmem [resolvable:$true] %s26
      %32 = dma.hbm_to_vmem [thread:$0]  %s2, 256, %s27, [#allocation3], 128, 128, 8
    $region13: #{tpu_custom_call.1} parent=1 // pred_fallthru
      _
    // Predicated region
    $region14: #{tpu_custom_call.1} parent=1 // pred_check
      _
    $region15: #{tpu_custom_call.1} parent=1 // pred_check_branch
      %34 = sbr.rel (0) target = $region17
    $region16: #{tpu_custom_call.1} parent=1 // pred_region
      _
    $region17: #{tpu_custom_call.1} parent=1 // pred_fallthru
      _
    // Predicated region
    $region18: #{tpu_custom_call.1} parent=1 // pred_check
      _
    $region19: #{tpu_custom_call.1} parent=1 // pred_check_branch
      %36 = sbr.rel (0) target = $region21
    $region20: #{tpu_custom_call.1} parent=1 // pred_region
      _
    $region21: #{tpu_custom_call.1} parent=1 // pred_fallthru
      _
    // Predicated region
    $region22: #{tpu_custom_call.1} parent=1 // pred_check
      _
    $region23: #{tpu_custom_call.1} parent=1 // pred_check_branch
      %38 = sbr.rel (0) target = $region25
    $region24: #{tpu_custom_call.1} parent=1 // pred_region
      _
    $region25: #{tpu_custom_call.1} parent=1 // pred_fallthru
      _
    // Predicated region
    $region26: #{tpu_custom_call.1} parent=1 // pred_check
      _
    $region27: #{tpu_custom_call.1} parent=1 // pred_check_branch
      %40 = sbr.rel (0) target = $region29
    $region28: #{tpu_custom_call.1} parent=1 // pred_region
      _
    $region29: #{tpu_custom_call.1} parent=1 // pred_fallthru
      _
    // Predicated region
    $region30: #{tpu_custom_call.1} parent=1 // pred_check
      _
    $region31: #{tpu_custom_call.1} parent=1 // pred_check_branch
      %42 = sbr.rel (0) target = $region33
    $region32: #{tpu_custom_call.1} parent=1 // pred_region
      _
    $region33: #{tpu_custom_call.1} parent=1 // pred_fallthru
      _
    // Predicated region
    $region34: #{tpu_custom_call.1} parent=1 // pred_check
      _
    $region35: #{tpu_custom_call.1} parent=1 // pred_check_branch
      %44 = sbr.rel (0) target = $region37
    $region36: #{tpu_custom_call.1} parent=1 // pred_region
      %45 = dma.done [#allocation3], 256
    $region37: #{tpu_custom_call.1} parent=1 // pred_fallthru
      _
    %v46 = vld [vmem:[%s0] sm:$0xff]
    %v47 = vld [vmem:[%s0 + $0x8] sm:$0xff]
    %v48 = vld [vmem:[%s1] sm:$0xff]
    %v49 = vld [vmem:[%s1 + $0x8] sm:$0xff]
    %v50 = vld [vmem:[#allocation2] sm:$0xff]
    %v51 = vld [vmem:[#allocation2 + $0x8] sm:$0xff]
    %v52 = vld [vmem:[%s3] sm:$0xff]
    %v53 = vld [vmem:[%s3 + $0x8] sm:$0xff]
    %v54 = vld [vmem:[%s4] sm:$0x1]
    %v55 = vld [vmem:[%s5] sm:$0xff]
    %v56 = vld [vmem:[%s5 + $0x8] sm:$0xff]
    %v57 = vld [vmem:[%s5 + $0x10] sm:$0xff]
    %v58 = vld [vmem:[%s5 + $0x18] sm:$0xff]
    %v59 = vld [vmem:[%s6] sm:$0x1]
    %v60 = vld [vmem:[%s7] sm:$0x3f]
    %v62 = vlaneseq
    %v63 = vshrl.u32 %v62, 7
    %v64 = vsub.s32 0, %v63
    %v65 = vrot.slane %v54, %v64
    %vm67 = vcmask 130048
    %v69 = vsel %vm67, %v46, 0
    %v72 = vsel %vm67, %v47, 0
    %74 = vmatprep.subr.mxu0 0.0
    %75 = vmatpush1.msra.mxu0 %v52
    %76 = vmatprep.subr.mxu0 0.0
    %77 = vmatpush1.msra.mxu0 %v53
    %78 = vmatprep.subr.mxu0 0.0
    %79 = vmatpush1.msra.mxu0 0.0
    %80 = vmatprep.subr.mxu0 0.0
    %81 = vmatpush1.msra.mxu0 0.0
    %82 = vmatprep.subr.mxu0 0.0
    %83 = vmatpush1.msra.mxu0 0.0
    %84 = vmatprep.subr.mxu0 0.0
    %85 = vmatpush1.msra.mxu0 0.0
    %86 = vmatprep.subr.mxu0 0.0
    %87 = vmatpush1.msra.mxu0 0.0
    %88 = vmatprep.subr.mxu0 0.0
    %89 = vmatpush1.msra.mxu0 0.0
    %90 = vmatprep.subr.mxu0 0.0
    %91 = vmatpush1.msra.mxu0 0.0
    %92 = vmatprep.subr.mxu0 0.0
    %93 = vmatpush1.msra.mxu0 0.0
    %94 = vmatprep.subr.mxu0 0.0
    %95 = vmatpush1.msra.mxu0 0.0
    %96 = vmatprep.subr.mxu0 0.0
    %97 = vmatpush1.msra.mxu0 0.0
    %98 = vmatprep.subr.mxu0 0.0
    %99 = vmatpush1.msra.mxu0 0.0
    %100 = vmatprep.subr.mxu0 0.0
    %101 = vmatpush1.msra.mxu0 0.0
    %102 = vmatprep.subr.mxu0 0.0
    %103 = vmatpush1.msra.mxu0 0.0
    %104 = vmatprep.subr.mxu0 0.0
    %105 = vmatpush1.msra.mxu0 0.0
    %106 = vmatprep.subr.mxu0 0.0
    %107 = vmatpush1.msra.mxu0 0.0
    %108 = vmatprep.subr.mxu0 0.0
    %109 = vmatpush1.msra.mxu0 0.0
    %110 = vmatprep.subr.mxu0 0.0
    %111 = vmatpush1.msra.mxu0 0.0
    %112 = vmatprep.subr.mxu0 0.0
    %113 = vmatpush1.msra.mxu0 0.0
    %114 = vmatprep.subr.mxu0 0.0
    %115 = vmatpush1.msra.mxu0 0.0
    %116 = vmatprep.subr.mxu0 0.0
    %117 = vmatpush1.msra.mxu0 0.0
    %118 = vmatprep.subr.mxu0 0.0
    %119 = vmatpush1.msra.mxu0 0.0
    %120 = vmatprep.subr.mxu0 0.0
    %121 = vmatpush1.msra.mxu0 0.0
    %122 = vmatprep.subr.mxu0 0.0
    %123 = vmatpush1.msra.mxu0 0.0
    %124 = vmatprep.subr.mxu0 0.0
    %125 = vmatpush1.msra.mxu0 0.0
    %126 = vmatprep.subr.mxu0 0.0
    %127 = vmatpush1.msra.mxu0 0.0
    %128 = vmatprep.subr.mxu0 0.0
    %129 = vmatpush1.msra.mxu0 0.0
    %130 = vmatprep.subr.mxu0 0.0
    %131 = vmatpush1.msra.mxu0 0.0
    %132 = vmatprep.subr.mxu0 0.0
    %133 = vmatpush1.msra.mxu0 0.0
    %134 = vmatprep.subr.mxu0 0.0
    %135 = vmatpush1.msra.mxu0 0.0
    %136 = vmatprep.subr.mxu0 0.0
    %137 = vmatpush1.msra.mxu0 0.0
    %138 = vmatprep.mubr.f32.mxu0 0.0
    %139 = vmatmul.mubr.f32.gmra.mrb[0].mxu0 %v69
    %v140 = vpop.f32.mrb[0].mxu0
    %v141 = vadd.f32 %v65, %v140
    %v142 = vpop.f32.mrb[0].mxu0
    %143 = vmatprep.mubr.f32.mxu0 0.0
    %144 = vmatmul.mubr.f32.gmra.mrb[0].mxu0 %v72
    %v145 = vpop.f32.mrb[0].mxu0
    %v146 = vadd.f32 %v65, %v145
    %v147 = vpop.f32.mrb[0].mxu0
    %148 = vdwg.mxu0
    %vm149 = vcmask 261120
    %v151 = vsel %vm149, %v141, 0
    %v154 = vsel %vm149, %v48, 0
    %156 = vmatprep.subr.mxu0 0.0
    %157 = vmatpush1.xpose.msra.mxu0 %v154
    %158 = vmatprep.subr.mxu0 0.0
    %159 = vmatpush1.xpose.msra.mxu0 0.0
    %160 = vmatprep.subr.mxu0 0.0
    %161 = vmatpush1.xpose.msra.mxu0 0.0
    %162 = vmatprep.subr.mxu0 0.0
    %163 = vmatpush1.xpose.msra.mxu0 0.0
    %164 = vmatprep.subr.mxu0 0.0
    %165 = vmatpush1.xpose.msra.mxu0 0.0
    %166 = vmatprep.subr.mxu0 0.0
    %167 = vmatpush1.xpose.msra.mxu0 0.0
    %168 = vmatprep.subr.mxu0 0.0
    %169 = vmatpush1.xpose.msra.mxu0 0.0
    %170 = vmatprep.subr.mxu0 0.0
    %171 = vmatpush1.xpose.msra.mxu0 0.0
    %172 = vmatprep.subr.mxu0 0.0
    %173 = vmatpush1.xpose.msra.mxu0 0.0
    %174 = vmatprep.subr.mxu0 0.0
    %175 = vmatpush1.xpose.msra.mxu0 0.0
    %176 = vmatprep.subr.mxu0 0.0
    %177 = vmatpush1.xpose.msra.mxu0 0.0
    %178 = vmatprep.subr.mxu0 0.0
    %179 = vmatpush1.xpose.msra.mxu0 0.0
    %180 = vmatprep.subr.mxu0 0.0
    %181 = vmatpush1.xpose.msra.mxu0 0.0
    %182 = vmatprep.subr.mxu0 0.0
    %183 = vmatpush1.xpose.msra.mxu0 0.0
    %184 = vmatprep.subr.mxu0 0.0
    %185 = vmatpush1.xpose.msra.mxu0 0.0
    %186 = vmatprep.subr.mxu0 0.0
    %187 = vmatpush1.xpose.msra.mxu0 0.0
    %188 = vmatprep.subr.mxu0 0.0
    %189 = vmatpush1.xpose.msra.mxu0 0.0
    %190 = vmatprep.subr.mxu0 0.0
    %191 = vmatpush1.xpose.msra.mxu0 0.0
    %192 = vmatprep.subr.mxu0 0.0
    %193 = vmatpush1.xpose.msra.mxu0 0.0
    %194 = vmatprep.subr.mxu0 0.0
    %195 = vmatpush1.xpose.msra.mxu0 0.0
    %196 = vmatprep.subr.mxu0 0.0
    %197 = vmatpush1.xpose.msra.mxu0 0.0
    %198 = vmatprep.subr.mxu0 0.0
    %199 = vmatpush1.xpose.msra.mxu0 0.0
    %200 = vmatprep.subr.mxu0 0.0
    %201 = vmatpush1.xpose.msra.mxu0 0.0
    %202 = vmatprep.subr.mxu0 0.0
    %203 = vmatpush1.xpose.msra.mxu0 0.0
    %204 = vmatprep.subr.mxu0 0.0
    %205 = vmatpush1.xpose.msra.mxu0 0.0
    %206 = vmatprep.subr.mxu0 0.0
    %207 = vmatpush1.xpose.msra.mxu0 0.0
    %208 = vmatprep.subr.mxu0 0.0
    %209 = vmatpush1.xpose.msra.mxu0 0.0
    %210 = vmatprep.subr.mxu0 0.0
    %211 = vmatpush1.xpose.msra.mxu0 0.0
    %212 = vmatprep.subr.mxu0 0.0
    %213 = vmatpush1.xpose.msra.mxu0 0.0
    %214 = vmatprep.subr.mxu0 0.0
    %215 = vmatpush1.xpose.msra.mxu0 0.0
    %216 = vmatprep.subr.mxu0 0.0
    %217 = vmatpush1.xpose.msra.mxu0 0.0
    %218 = vmatprep.subr.mxu0 0.0
    %219 = vmatpush1.xpose.msra.mxu0 0.0
    %220 = vmatprep.mubr.f32.mxu0 0.0
    %221 = vmatmul.mubr.f32.gmra.mrb[0].mxu0 %v151
    %v222 = vpop.f32.mrb[0].mxu0
    %v223 = vadd.f32 0.0, %v222
    %v224 = vpop.f32.mrb[0].mxu0
    %225 = vdwg.mxu0
    %v227 = vsel %vm149, %v146, 0
    %v230 = vsel %vm149, %v49, 0
    %232 = vmatprep.subr.mxu0 0.0
    %233 = vmatpush1.xpose.msra.mxu0 %v230
    %234 = vmatprep.subr.mxu0 0.0
    %235 = vmatpush1.xpose.msra.mxu0 0.0
    %236 = vmatprep.subr.mxu0 0.0
    %237 = vmatpush1.xpose.msra.mxu0 0.0
    %238 = vmatprep.subr.mxu0 0.0
    %239 = vmatpush1.xpose.msra.mxu0 0.0
    %240 = vmatprep.subr.mxu0 0.0
    %241 = vmatpush1.xpose.msra.mxu0 0.0
    %242 = vmatprep.subr.mxu0 0.0
    %243 = vmatpush1.xpose.msra.mxu0 0.0
    %244 = vmatprep.subr.mxu0 0.0
    %245 = vmatpush1.xpose.msra.mxu0 0.0
    %246 = vmatprep.subr.mxu0 0.0
    %247 = vmatpush1.xpose.msra.mxu0 0.0
    %248 = vmatprep.subr.mxu0 0.0
    %249 = vmatpush1.xpose.msra.mxu0 0.0
    %250 = vmatprep.subr.mxu0 0.0
    %251 = vmatpush1.xpose.msra.mxu0 0.0
    %252 = vmatprep.subr.mxu0 0.0
    %253 = vmatpush1.xpose.msra.mxu0 0.0
    %254 = vmatprep.subr.mxu0 0.0
    %255 = vmatpush1.xpose.msra.mxu0 0.0
    %256 = vmatprep.subr.mxu0 0.0
    %257 = vmatpush1.xpose.msra.mxu0 0.0
    %258 = vmatprep.subr.mxu0 0.0
    %259 = vmatpush1.xpose.msra.mxu0 0.0
    %260 = vmatprep.subr.mxu0 0.0
    %261 = vmatpush1.xpose.msra.mxu0 0.0
    %262 = vmatprep.subr.mxu0 0.0
    %263 = vmatpush1.xpose.msra.mxu0 0.0
    %264 = vmatprep.subr.mxu0 0.0
    %265 = vmatpush1.xpose.msra.mxu0 0.0
    %266 = vmatprep.subr.mxu0 0.0
    %267 = vmatpush1.xpose.msra.mxu0 0.0
    %268 = vmatprep.subr.mxu0 0.0
    %269 = vmatpush1.xpose.msra.mxu0 0.0
    %270 = vmatprep.subr.mxu0 0.0
    %271 = vmatpush1.xpose.msra.mxu0 0.0
    %272 = vmatprep.subr.mxu0 0.0
    %273 = vmatpush1.xpose.msra.mxu0 0.0
    %274 = vmatprep.subr.mxu0 0.0
    %275 = vmatpush1.xpose.msra.mxu0 0.0
    %276 = vmatprep.subr.mxu0 0.0
    %277 = vmatpush1.xpose.msra.mxu0 0.0
    %278 = vmatprep.subr.mxu0 0.0
    %279 = vmatpush1.xpose.msra.mxu0 0.0
    %280 = vmatprep.subr.mxu0 0.0
    %281 = vmatpush1.xpose.msra.mxu0 0.0
    %282 = vmatprep.subr.mxu0 0.0
    %283 = vmatpush1.xpose.msra.mxu0 0.0
    %284 = vmatprep.subr.mxu0 0.0
    %285 = vmatpush1.xpose.msra.mxu0 0.0
    %286 = vmatprep.subr.mxu0 0.0
    %287 = vmatpush1.xpose.msra.mxu0 0.0
    %288 = vmatprep.subr.mxu0 0.0
    %289 = vmatpush1.xpose.msra.mxu0 0.0
    %290 = vmatprep.subr.mxu0 0.0
    %291 = vmatpush1.xpose.msra.mxu0 0.0
    %292 = vmatprep.subr.mxu0 0.0
    %293 = vmatpush1.xpose.msra.mxu0 0.0
    %294 = vmatprep.subr.mxu0 0.0
    %295 = vmatpush1.xpose.msra.mxu0 0.0
    %296 = vmatprep.mubr.f32.mxu0 0.0
    %297 = vmatmul.mubr.f32.gmra.mrb[0].mxu0 %v227
    %v298 = vpop.f32.mrb[0].mxu0
    %v299 = vadd.f32 0.0, %v298
    %v300 = vpop.f32.mrb[0].mxu0
    %301 = vdwg.mxu0
    %vm302 = vcmp.gt.s32.totalorder %v50, 0
    %vm303 = vcmp.gt.s32.totalorder %v51, 0
    %v304 = vsel %vm302, %v223, 0.0
    %v305 = vsel %vm303, %v299, 0.0
    %vm306 = vcmask 64512
    %v307 = vsel %vm306, %v304, -inf
    %v308 = vrot.slane %v307, 4
    %v309 = vmax.f32 %v307, %v308
    %v310 = vrot.slane %v309, 2
    %v311 = vmax.f32 %v309, %v310
    %v312 = vrot.slane %v311, 1
    %v313 = vmax.f32 %v311, %v312
    %v314 = vsel %vm306, %v305, -inf
    %v315 = vrot.slane %v314, 4
    %v316 = vmax.f32 %v314, %v315
    %v317 = vrot.slane %v316, 2
    %v318 = vmax.f32 %v316, %v317
    %v319 = vrot.slane %v318, 1
    %v320 = vmax.f32 %v318, %v319
    %v321 = vsub.f32 %v223, %v313
    %v322 = vsub.f32 %v299, %v320
    %v323 = vmul.f32 %v321, 1.442695
    %v324 = vpow.pop %v323
    %v325 = vmul.f32 %v322, 1.442695
    %v326 = vpow.pop %v325
    %v327 = vsel %vm302, %v324, 0.0
    %v328 = vsel %vm303, %v326, 0.0
    %v329 = vsel %vm306, %v327, 0.0
    %v330 = vrot.slane %v329, 4
    %v331 = vadd.f32 %v329, %v330
    %v332 = vrot.slane %v331, 2
    %v333 = vadd.f32 %v331, %v332
    %v334 = vrot.slane %v333, 1
    %v335 = vadd.f32 %v333, %v334
    %v336 = vsel %vm306, %v328, 0.0
    %v337 = vrot.slane %v336, 4
    %v338 = vadd.f32 %v336, %v337
    %v339 = vrot.slane %v338, 2
    %v340 = vadd.f32 %v338, %v339
    %v341 = vrot.slane %v340, 1
    %v342 = vadd.f32 %v340, %v341
    %v343 = vadd.f32 %v335, 1e-10
    %v344 = vadd.f32 %v342, 1e-10
    %v345 = vrcp.pop %v343
    %v346 = vrcp.pop %v344
    %v347 = vmul.f32 %v327, %v345
    %v348 = vmul.f32 %v328, %v346
    %vm349 = vcmp.eq.s32.totalorder %v50, 0
    %vm350 = vcmp.eq.s32.totalorder %v51, 0
    %v351 = vsel %vm349, %v347, 0.0
    %v352 = vsel %vm350, %v348, 0.0
    %v353 = vsel %vm306, %v351, 0.0
    %v354 = vrot.slane %v353, 4
    %v355 = vadd.f32 %v353, %v354
    %v356 = vrot.slane %v355, 2
    %v357 = vadd.f32 %v355, %v356
    %v358 = vrot.slane %v357, 1
    %v359 = vadd.f32 %v357, %v358
    %v360 = vsel %vm306, %v352, 0.0
    %v361 = vrot.slane %v360, 4
    %v362 = vadd.f32 %v360, %v361
    %v363 = vrot.slane %v362, 2
    %v364 = vadd.f32 %v362, %v363
    %v365 = vrot.slane %v364, 1
    %v366 = vadd.f32 %v364, %v365
    %vm367 = vcmp.eq.s32.totalorder %v50, 1
    %vm368 = vcmp.eq.s32.totalorder %v51, 1
    %v369 = vsel %vm367, %v347, 0.0
    %v370 = vsel %vm368, %v348, 0.0
    %v371 = vsel %vm306, %v369, 0.0
    %v372 = vrot.slane %v371, 4
    %v373 = vadd.f32 %v371, %v372
    %v374 = vrot.slane %v373, 2
    %v375 = vadd.f32 %v373, %v374
    %v376 = vrot.slane %v375, 1
    %v377 = vadd.f32 %v375, %v376
    %v378 = vsel %vm306, %v370, 0.0
    %v379 = vrot.slane %v378, 4
    %v380 = vadd.f32 %v378, %v379
    %v381 = vrot.slane %v380, 2
    %v382 = vadd.f32 %v380, %v381
    %v383 = vrot.slane %v382, 1
    %v384 = vadd.f32 %v382, %v383
    %vm385 = vcmp.eq.s32.totalorder %v50, 2
    %vm386 = vcmp.eq.s32.totalorder %v51, 2
    %v387 = vsel %vm385, %v347, 0.0
    %v388 = vsel %vm386, %v348, 0.0
    %v389 = vsel %vm306, %v387, 0.0
    %v390 = vrot.slane %v389, 4
    %v391 = vadd.f32 %v389, %v390
    %v392 = vrot.slane %v391, 2
    %v393 = vadd.f32 %v391, %v392
    %v394 = vrot.slane %v393, 1
    %v395 = vadd.f32 %v393, %v394
    %v396 = vsel %vm306, %v388, 0.0
    %v397 = vrot.slane %v396, 4
    %v398 = vadd.f32 %v396, %v397
    %v399 = vrot.slane %v398, 2
    %v400 = vadd.f32 %v398, %v399
    %v401 = vrot.slane %v400, 1
    %v402 = vadd.f32 %v400, %v401
    %vm403 = vcmp.eq.s32.totalorder %v50, 3
    %vm404 = vcmp.eq.s32.totalorder %v51, 3
    %v405 = vsel %vm403, %v347, 0.0
    %v406 = vsel %vm404, %v348, 0.0
    %v407 = vsel %vm306, %v405, 0.0
    %v408 = vrot.slane %v407, 4
    %v409 = vadd.f32 %v407, %v408
    %v410 = vrot.slane %v409, 2
    %v411 = vadd.f32 %v409, %v410
    %v412 = vrot.slane %v411, 1
    %v413 = vadd.f32 %v411, %v412
    %v414 = vsel %vm306, %v406, 0.0
    %v415 = vrot.slane %v414, 4
    %v416 = vadd.f32 %v414, %v415
    %v417 = vrot.slane %v416, 2
    %v418 = vadd.f32 %v416, %v417
    %v419 = vrot.slane %v418, 1
    %v420 = vadd.f32 %v418, %v419
    %vm421 = vcmp.eq.s32.totalorder %v50, 4
    %vm422 = vcmp.eq.s32.totalorder %v51, 4
    %v423 = vsel %vm421, %v347, 0.0
    %v424 = vsel %vm422, %v348, 0.0
    %v425 = vsel %vm306, %v423, 0.0
    %v426 = vrot.slane %v425, 4
    %v427 = vadd.f32 %v425, %v426
    %v428 = vrot.slane %v427, 2
    %v429 = vadd.f32 %v427, %v428
    %v430 = vrot.slane %v429, 1
    %v431 = vadd.f32 %v429, %v430
    %v432 = vsel %vm306, %v424, 0.0
    %v433 = vrot.slane %v432, 4
    %v434 = vadd.f32 %v432, %v433
    %v435 = vrot.slane %v434, 2
    %v436 = vadd.f32 %v434, %v435
    %v437 = vrot.slane %v436, 1
    %v438 = vadd.f32 %v436, %v437
    %vm439 = vcmp.eq.s32.totalorder %v50, 5
    %vm440 = vcmp.eq.s32.totalorder %v51, 5
    %v441 = vsel %vm439, %v347, 0.0
    %v442 = vsel %vm440, %v348, 0.0
    %v443 = vsel %vm306, %v441, 0.0
    %v444 = vrot.slane %v443, 4
    %v445 = vadd.f32 %v443, %v444
    %v446 = vrot.slane %v445, 2
    %v447 = vadd.f32 %v445, %v446
    %v448 = vrot.slane %v447, 1
    %v449 = vadd.f32 %v447, %v448
    %v450 = vsel %vm306, %v442, 0.0
    %v451 = vrot.slane %v450, 4
    %v452 = vadd.f32 %v450, %v451
    %v453 = vrot.slane %v452, 2
    %v454 = vadd.f32 %v452, %v453
    %v455 = vrot.slane %v454, 1
    %v456 = vadd.f32 %v454, %v455
    %458 = vbcast.lane.b32.xlu0 %v359, 256
    %v459 = vpop.permute.xlu0 %458
    %461 = vbcast.lane.b32.xlu0 %v366, 256
    %v462 = vpop.permute.xlu0 %461
    %464 = vbcast.lane.b32.xlu0 %v377, 256
    %v465 = vpop.permute.xlu0 %464
    %467 = vbcast.lane.b32.xlu0 %v384, 256
    %v468 = vpop.permute.xlu0 %467
    %470 = vbcast.lane.b32.xlu0 %v395, 256
    %v471 = vpop.permute.xlu0 %470
    %473 = vbcast.lane.b32.xlu0 %v402, 256
    %v474 = vpop.permute.xlu0 %473
    %476 = vbcast.lane.b32.xlu0 %v413, 256
    %v477 = vpop.permute.xlu0 %476
    %479 = vbcast.lane.b32.xlu0 %v420, 256
    %v480 = vpop.permute.xlu0 %479
    %482 = vbcast.lane.b32.xlu0 %v431, 256
    %v483 = vpop.permute.xlu0 %482
    %485 = vbcast.lane.b32.xlu0 %v438, 256
    %v486 = vpop.permute.xlu0 %485
    %488 = vbcast.lane.b32.xlu0 %v449, 256
    %v489 = vpop.permute.xlu0 %488
    %491 = vbcast.lane.b32.xlu0 %v456, 256
    %v492 = vpop.permute.xlu0 %491
    %vm493 = vcmask 7168
    %v494 = vsel %vm493, %v459, %v465
    %v495 = vsel %vm493, %v462, %v468
    %vm496 = vcmask 15360
    %v497 = vsel %vm496, %v494, %v471
    %v498 = vsel %vm496, %v495, %v474
    %vm499 = vcmask 23552
    %v500 = vsel %vm499, %v497, %v477
    %v501 = vsel %vm499, %v498, %v480
    %vm502 = vcmask 31744
    %v503 = vsel %vm502, %v500, %v483
    %v504 = vsel %vm502, %v501, %v486
    %vm505 = vcmask 39936
    %v506 = vsel %vm505, %v503, %v489
    %v507 = vsel %vm505, %v504, %v492
    %vm508 = vcmask 48128
    %v510 = vsel %vm508, %v506, 0
    %v513 = vsel %vm508, %v507, 0
    %vm515 = vcmask 1045504
    %v517 = vsel %vm515, %v60, 0
    %519 = vmatprep.subr.mxu0 0.0
    %520 = vmatpush1.msra.mxu0 %v517
    %521 = vmatprep.subr.mxu0 0.0
    %522 = vmatpush1.msra.mxu0 0.0
    %523 = vmatprep.subr.mxu0 0.0
    %524 = vmatpush1.msra.mxu0 0.0
    %525 = vmatprep.subr.mxu0 0.0
    %526 = vmatpush1.msra.mxu0 0.0
    %527 = vmatprep.subr.mxu0 0.0
    %528 = vmatpush1.msra.mxu0 0.0
    %529 = vmatprep.subr.mxu0 0.0
    %530 = vmatpush1.msra.mxu0 0.0
    %531 = vmatprep.subr.mxu0 0.0
    %532 = vmatpush1.msra.mxu0 0.0
    %533 = vmatprep.subr.mxu0 0.0
    %534 = vmatpush1.msra.mxu0 0.0
    %535 = vmatprep.subr.mxu0 0.0
    %536 = vmatpush1.msra.mxu0 0.0
    %537 = vmatprep.subr.mxu0 0.0
    %538 = vmatpush1.msra.mxu0 0.0
    %539 = vmatprep.subr.mxu0 0.0
    %540 = vmatpush1.msra.mxu0 0.0
    %541 = vmatprep.subr.mxu0 0.0
    %542 = vmatpush1.msra.mxu0 0.0
    %543 = vmatprep.subr.mxu0 0.0
    %544 = vmatpush1.msra.mxu0 0.0
    %545 = vmatprep.subr.mxu0 0.0
    %546 = vmatpush1.msra.mxu0 0.0
    %547 = vmatprep.subr.mxu0 0.0
    %548 = vmatpush1.msra.mxu0 0.0
    %549 = vmatprep.subr.mxu0 0.0
    %550 = vmatpush1.msra.mxu0 0.0
    %551 = vmatprep.subr.mxu0 0.0
    %552 = vmatpush1.msra.mxu0 0.0
    %553 = vmatprep.subr.mxu0 0.0
    %554 = vmatpush1.msra.mxu0 0.0
    %555 = vmatprep.subr.mxu0 0.0
    %556 = vmatpush1.msra.mxu0 0.0
    %557 = vmatprep.subr.mxu0 0.0
    %558 = vmatpush1.msra.mxu0 0.0
    %559 = vmatprep.subr.mxu0 0.0
    %560 = vmatpush1.msra.mxu0 0.0
    %561 = vmatprep.subr.mxu0 0.0
    %562 = vmatpush1.msra.mxu0 0.0
    %563 = vmatprep.subr.mxu0 0.0
    %564 = vmatpush1.msra.mxu0 0.0
    %565 = vmatprep.subr.mxu0 0.0
    %566 = vmatpush1.msra.mxu0 0.0
    %567 = vmatprep.subr.mxu0 0.0
    %568 = vmatpush1.msra.mxu0 0.0
    %569 = vmatprep.subr.mxu0 0.0
    %570 = vmatpush1.msra.mxu0 0.0
    %571 = vmatprep.subr.mxu0 0.0
    %572 = vmatpush1.msra.mxu0 0.0
    %573 = vmatprep.subr.mxu0 0.0
    %574 = vmatpush1.msra.mxu0 0.0
    %575 = vmatprep.subr.mxu0 0.0
    %576 = vmatpush1.msra.mxu0 0.0
    %577 = vmatprep.subr.mxu0 0.0
    %578 = vmatpush1.msra.mxu0 0.0
    %579 = vmatprep.subr.mxu0 0.0
    %580 = vmatpush1.msra.mxu0 0.0
    %581 = vmatprep.subr.mxu0 0.0
    %582 = vmatpush1.msra.mxu0 0.0
    %583 = vmatprep.mubr.f32.mxu0 0.0
    %584 = vmatmul.mubr.f32.gmra.mrb[0].mxu0 %v510
    %v585 = vpop.f32.mrb[0].mxu0
    %v586 = vadd.f32 0.0, %v585
    %v587 = vpop.f32.mrb[0].mxu0
    %588 = vmatprep.mubr.f32.mxu0 0.0
    %589 = vmatmul.mubr.f32.gmra.mrb[0].mxu0 %v513
    %v590 = vpop.f32.mrb[0].mxu0
    %v591 = vadd.f32 0.0, %v590
    %v592 = vpop.f32.mrb[0].mxu0
    %593 = vdwg.mxu0
    %594 = vmatprep.subr.mxu0 0.0
    %595 = vmatpush1.msra.mxu0 %v55
    %596 = vmatprep.subr.mxu0 0.0
    %597 = vmatpush1.msra.mxu0 %v56
    %598 = vmatprep.subr.mxu0 0.0
    %599 = vmatpush1.msra.mxu0 %v57
    %600 = vmatprep.subr.mxu0 0.0
    %601 = vmatpush1.msra.mxu0 %v58
    %602 = vmatprep.subr.mxu0 0.0
    %603 = vmatpush1.msra.mxu0 0.0
    %604 = vmatprep.subr.mxu0 0.0
    %605 = vmatpush1.msra.mxu0 0.0
    %606 = vmatprep.subr.mxu0 0.0
    %607 = vmatpush1.msra.mxu0 0.0
    %608 = vmatprep.subr.mxu0 0.0
    %609 = vmatpush1.msra.mxu0 0.0
    %610 = vmatprep.subr.mxu0 0.0
    %611 = vmatpush1.msra.mxu0 0.0
    %612 = vmatprep.subr.mxu0 0.0
    %613 = vmatpush1.msra.mxu0 0.0
    %614 = vmatprep.subr.mxu0 0.0
    %615 = vmatpush1.msra.mxu0 0.0
    %616 = vmatprep.subr.mxu0 0.0
    %617 = vmatpush1.msra.mxu0 0.0
    %618 = vmatprep.subr.mxu0 0.0
    %619 = vmatpush1.msra.mxu0 0.0
    %620 = vmatprep.subr.mxu0 0.0
    %621 = vmatpush1.msra.mxu0 0.0
    %622 = vmatprep.subr.mxu0 0.0
    %623 = vmatpush1.msra.mxu0 0.0
    %624 = vmatprep.subr.mxu0 0.0
    %625 = vmatpush1.msra.mxu0 0.0
    %626 = vmatprep.subr.mxu0 0.0
    %627 = vmatpush1.msra.mxu0 0.0
    %628 = vmatprep.subr.mxu0 0.0
    %629 = vmatpush1.msra.mxu0 0.0
    %630 = vmatprep.subr.mxu0 0.0
    %631 = vmatpush1.msra.mxu0 0.0
    %632 = vmatprep.subr.mxu0 0.0
    %633 = vmatpush1.msra.mxu0 0.0
    %634 = vmatprep.subr.mxu0 0.0
    %635 = vmatpush1.msra.mxu0 0.0
    %636 = vmatprep.subr.mxu0 0.0
    %637 = vmatpush1.msra.mxu0 0.0
    %638 = vmatprep.subr.mxu0 0.0
    %639 = vmatpush1.msra.mxu0 0.0
    %640 = vmatprep.subr.mxu0 0.0
    %641 = vmatpush1.msra.mxu0 0.0
    %642 = vmatprep.subr.mxu0 0.0
    %643 = vmatpush1.msra.mxu0 0.0
    %644 = vmatprep.subr.mxu0 0.0
    %645 = vmatpush1.msra.mxu0 0.0
    %646 = vmatprep.subr.mxu0 0.0
    %647 = vmatpush1.msra.mxu0 0.0
    %648 = vmatprep.subr.mxu0 0.0
    %649 = vmatpush1.msra.mxu0 0.0
    %650 = vmatprep.subr.mxu0 0.0
    %651 = vmatpush1.msra.mxu0 0.0
    %652 = vmatprep.subr.mxu0 0.0
    %653 = vmatpush1.msra.mxu0 0.0
    %654 = vmatprep.subr.mxu0 0.0
    %655 = vmatpush1.msra.mxu0 0.0
    %656 = vmatprep.subr.mxu0 0.0
    %657 = vmatpush1.msra.mxu0 0.0
    %658 = vmatprep.mubr.f32.mxu0 0.0
    %659 = vmatmul.mubr.f32.gmra.mrb[0].mxu0 %v154
    %v660 = vpop.f32.mrb[0].mxu0
    %v661 = vadd.f32 %v586, %v660
    %v662 = vpop.f32.mrb[0].mxu0
    %663 = vmatprep.mubr.f32.mxu0 0.0
    %664 = vmatmul.mubr.f32.gmra.mrb[0].mxu0 %v230
    %v665 = vpop.f32.mrb[0].mxu0
    %v666 = vadd.f32 %v591, %v665
    %v667 = vpop.f32.mrb[0].mxu0
    %668 = vdwg.mxu0
    %v670 = vlaneseq
    %v671 = vshrl.u32 %v670, 7
    %v672 = vsub.s32 0, %v671
    %v673 = vrot.slane %v59, %v672
    %v675 = vadd.f32 %v661, %v673
    %v676 = vadd.f32 %v666, %v673
    %677 = vst.msk [vmem:[%s8] sm:$0xff] %vm505, %v675
    %678 = vst.msk [vmem:[%s8 + $0x8] sm:$0xff] %vm505, %v676
    %v679 = vsel %vm505, %v675, -inf
    %680 = vmax.index.xlane.f32.xlu0 %v679
    %v681 = vpop.xlane.xlu0 %680
    %v682 = vsel %vm505, %v676, -inf
    %683 = vmax.index.xlane.f32.xlu0 %v682
    %v684 = vpop.xlane.xlu0 %683
    %v685 = vlaneseq
    %v686 = vand.u32 %v685, 127
    %v687 = vlaneseq
    %v688 = vshrl.u32 %v687, 7
    %v689 = vsub.s32 %v686, %v688
    %v690 = vrot.slane %v681, %v689
    %v691 = vlaneseq
    %v692 = vshrl.u32 %v691, 7
    %v693 = vsub.s32 %v686, %v692
    %v694 = vrot.slane %v684, %v693
    %vm695 = vcmask 1041409
    %v696 = vsel %vm695, %v694, %v690
    %vm697 = vcmask 58368
    %698 = vst.msk [vmem:[#allocation5] sm:$0x3] %vm697, %v696
    // Predicated region
    $region38: #{tpu_custom_call.1} parent=1 // pred_check
      _
    $region39: #{tpu_custom_call.1} parent=1 // pred_check_branch
      %700 = sbr.rel (0) target = $region41
    $region40: #{tpu_custom_call.1} parent=1 // pred_region
      _
    $region41: #{tpu_custom_call.1} parent=1 // pred_fallthru
      _
    // Predicated region
    $region42: #{tpu_custom_call.1} parent=1 // pred_check
      _
    $region43: #{tpu_custom_call.1} parent=1 // pred_check_branch
      %702 = sbr.rel (0) target = $region45
    $region44: #{tpu_custom_call.1} parent=1 // pred_region
      %s704 = ssub.s32 32, 32
      %705 = vsyncadd [#allocation4], %s704
      %s707 = sshll.u32 [#allocation5], 4
      %s708 = int_to_ptr.vmem [resolvable:$true] %s707
      %710 = dma.vmem_to_hbm [thread:$0]  %s708, 32, %s9, [#allocation4]
    $region45: #{tpu_custom_call.1} parent=1 // pred_fallthru
      _
    // Predicated region
    $region46: #{tpu_custom_call.1} parent=1 // pred_check
      _
    $region47: #{tpu_custom_call.1} parent=1 // pred_check_branch
      %712 = sbr.rel (0) target = $region49
    $region48: #{tpu_custom_call.1} parent=1 // pred_region
      _
    $region49: #{tpu_custom_call.1} parent=1 // pred_fallthru
      _
    // Predicated region
    $region50: #{tpu_custom_call.1} parent=1 // pred_check
      _
    $region51: #{tpu_custom_call.1} parent=1 // pred_check_branch
      %714 = sbr.rel (0) target = $region53
    $region52: #{tpu_custom_call.1} parent=1 // pred_region
      %715 = dma.done [#allocation4], 32
    $region53: #{tpu_custom_call.1} parent=1 // pred_fallthru
      _
    %716 = vsyncpa [#allocation3], 1
    %717 = vsyncpa [#allocation4], 1

</llo_original>
